<compile_context>
chip_gen: v6e
topology: v6e:2x2x1
jax: 0.10.0
libtpu: 0.0.40
codegen_flags: <defaults>
</compile_context>

<pallas_src>
import jax
import jax.numpy as jnp
from jax.experimental import pallas as pl
from jax.experimental.pallas import tpu as pltpu

_LANE = 128
# Budget for the in/out double buffers (2 bufs x (in + out) x tile bytes).
_TILE_BYTES_BUDGET = 16 * 1024 * 1024
_VMEM_LIMIT_BYTES = 32 * 1024 * 1024


def _drop_path_kernel(x_ref, scale_ref, o_ref):
    # x_ref: (B, TN) tile; scale_ref: (B, 1), resident across the whole grid.
    o_ref[...] = x_ref[...] * scale_ref[...]


def _choose_col_tile(batch, n_cols, itemsize):
    """Largest lane-dense column tile whose double buffers fit the VMEM budget."""
    max_tn = _TILE_BYTES_BUDGET // (4 * max(batch, 1) * itemsize)
    max_tn = max(_LANE, (max_tn // _LANE) * _LANE)
    if n_cols <= max_tn:
        return n_cols                 # single full-width block (block == full dim)
    return max_tn                     # multiple of 128; tail block handled by Pallas


def _drop_path_2d(x2d, scale):
    """out[b, :] = x2d[b, :] * scale[b, 0] via a single elementwise pallas_call."""
    B, N = x2d.shape
    tn = _choose_col_tile(B, N, x2d.dtype.itemsize)
    grid = (pl.cdiv(N, tn),)
    return pl.pallas_call(
        _drop_path_kernel,
        out_shape=jax.ShapeDtypeStruct((B, N), x2d.dtype),
        grid_spec=pltpu.PrefetchScalarGridSpec(
            num_scalar_prefetch=0,
            grid=grid,
            in_specs=[
                pl.BlockSpec((B, tn), lambda j: (0, j)),
                pl.BlockSpec((B, 1), lambda j: (0, 0)),   # scale stays resident
            ],
            out_specs=pl.BlockSpec((B, tn), lambda j: (0, j)),
        ),
        compiler_params=pltpu.CompilerParams(
            dimension_semantics=("parallel",),
            vmem_limit_bytes=_VMEM_LIMIT_BYTES,
        ),
    )(x2d, scale)


def drop_path(x, drop_prob: float = 0.0, training: bool = False, *, key=None):
    """Mirror of the PyTorch drop_path (stochastic depth, per sample)."""
    if drop_prob == 0.0 or not training:
        return x
    if key is None:
        # TODO(synk): torch uses implicit global RNG state; JAX needs an explicit key.
        key = jax.random.PRNGKey(0)
    keep_prob = 1.0 - drop_prob
    B = x.shape[0]
    # Bernoulli(keep_prob) per sample, exactly like floor(keep_prob + U[0,1)).
    u = jax.random.uniform(key, (B, 1), dtype=jnp.float32)
    mask = jnp.floor(keep_prob + u)
    scale = (mask / keep_prob).astype(x.dtype)          # 0 or 1/keep_prob, per sample
    x2d = x.reshape(B, -1)                              # contiguous view, no HBM copy
    y2d = _drop_path_2d(x2d, scale)
    return y2d.reshape(x.shape)


class DropPath:
    """Module-style wrapper mirroring nn.Module DropPath."""

    def __init__(self, drop_prob=None):
        self.drop_prob = drop_prob

    def __call__(self, x, *, training=False, key=None):
        return drop_path(x, self.drop_prob or 0.0, training, key=key)


if __name__ == "__main__":
    key = jax.random.PRNGKey(0)
    k_x, k_mask = jax.random.split(key)

    B, C, H, W = 2, 4, 16, 16
    drop_prob = 0.25
    x = jax.random.normal(k_x, (B, C, H, W), jnp.float32)

    # Training path -> Pallas kernel.
    y = drop_path(x, drop_prob, training=True, key=k_mask)
    y = jax.block_until_ready(y)
    assert y.shape == x.shape and y.dtype == x.dtype

    # Pure-JAX reference with the identical per-sample mask (PyTorch order of ops).
    keep_prob = 1.0 - drop_prob
    u = jax.random.uniform(k_mask, (B, 1), dtype=jnp.float32)
    mask = jnp.floor(keep_prob + u).reshape(B, 1, 1, 1)
    ref = x / keep_prob * mask
    assert jnp.max(jnp.abs(y - ref)) < 1e-5

    # Eval / drop_prob == 0 paths are exact identity (no kernel launched).
    y_eval = drop_path(x, drop_prob, training=False)
    assert jnp.array_equal(y_eval, x)
    y_zero = drop_path(x, 0.0, training=True, key=k_mask)
    assert jnp.array_equal(y_zero, x)

    print("KERNEL_OK")
</pallas_src>

<mosaic_0001>
module attributes {stable_mosaic.version = 11 : i64} {
  func.func @_drop_path_kernel(%arg0: i32, %arg1: memref<2x1024xf32, #tpu.memory_space<vmem>>, %arg2: memref<2x1xf32, #tpu.memory_space<vmem>>, %arg3: memref<2x1024xf32, #tpu.memory_space<vmem>>) attributes {dimension_semantics = [#tpu.dimension_semantics<parallel>], iteration_bounds = array<i64: 1>, scalar_prefetch = 0 : i64, scratch_operands = 0 : i64, tpu.core_type = #tpu.core_type<tc>, window_params = [{transform_indices = @transform_0, window_bounds = array<i64: 2, 1024>}, {pipeline_mode = #tpu.pipeline_mode<synchronous>, transform_indices = @transform_1, window_bounds = array<i64: 2, 1>}, {transform_indices = @transform_2, window_bounds = array<i64: 2, 1024>}]} {
    %c0 = arith.constant 0 : index
    %c0_0 = arith.constant 0 : index
    %0 = vector.load %arg1[%c0, %c0_0] : memref<2x1024xf32, #tpu.memory_space<vmem>>, vector<2x1024xf32>
    %c0_1 = arith.constant 0 : index
    %c0_2 = arith.constant 0 : index
    %1 = vector.load %arg2[%c0_1, %c0_2] : memref<2x1xf32, #tpu.memory_space<vmem>>, vector<2x1xf32>
    %2 = vector.broadcast %1 : vector<2x1xf32> to vector<2x1024xf32>
    %3 = arith.mulf %0, %2 : vector<2x1024xf32>
    %c0_3 = arith.constant 0 : index
    %c0_4 = arith.constant 0 : index
    %4 = vector.load %arg3[%c0_3, %c0_4] : memref<2x1024xf32, #tpu.memory_space<vmem>>, vector<2x1024xf32>
    tpu.vector_store %arg3[%c0_3, %c0_4], %3 {strides = array<i32>} : memref<2x1024xf32, #tpu.memory_space<vmem>>, vector<2x1024xf32>,
    return
  }
  func.func @transform_0(%arg0: i32) -> (i32, i32) {
    %c0_i32 = arith.constant 0 : i32
    %c0_i32_0 = arith.constant 0 : i32
    return %c0_i32, %arg0 : i32, i32
  }
  func.func @transform_1(%arg0: i32) -> (i32, i32) {
    %c0_i32 = arith.constant 0 : i32
    %c0_i32_0 = arith.constant 0 : i32
    %c0_i32_1 = arith.constant 0 : i32
    return %c0_i32, %c0_i32_0 : i32, i32
  }
  func.func @transform_2(%arg0: i32) -> (i32, i32) {
    %c0_i32 = arith.constant 0 : i32
    %c0_i32_0 = arith.constant 0 : i32
    return %c0_i32, %arg0 : i32, i32
  }
}

</mosaic_0001>

<llo_original>
// kernel: tpu_custom_call.1
$region0: #{tpu_custom_call.1}
  #allocation0 [shape = 'u32[]', space=smem, size = 0x4, offset = 0x4, fixed_abs, tag = 'smem constant byte address 0x4 - core index']
  #allocation1 [shape = 'u32[144,128]{1,0:T(1,128)}', space=vmem, size = 0x12000, scoped, tag = 'internal scratch']
  %s0 = inlined_call_operand.hbm [shape: f32[2,1024], index: 0, kind: input, shape index: {}]
  %s1 = inlined_call_operand.vmem [shape: f32[2,1], index: 1, kind: input, shape index: {}]
  %s2 = inlined_call_operand.hbm [shape: f32[2,1024], index: 2, kind: output, shape index: {}]
  %s3 = sld [smem:[#allocation0]]
  $region22: #{tpu_custom_call.1} parent=0
    _
  %s5 = ssub.s32 1, %s3
  %s6 = scalar_select 0, %s5, %s3
  $region1: #{tpu_custom_call.1} parent=0
    #allocation2 [shape = 'u8[8192]{0}', space=vmem, size = 0x2000, scoped, tag = 'input window, operand 0, single buffered']
    #allocation3 [shape = 's32[1]{0}', space=sflag, size = 0x4, scoped, tag = 'scoped memory for tpu_custom_call.1']
    #allocation4 [shape = 's32[1]{0}', space=sflag, size = 0x4, scoped, tag = 'scoped memory for tpu_custom_call.1']
    #allocation5 [shape = 'u8[8192]{0}', space=vmem, size = 0x2000, scoped, tag = 'output window, operand 0, single buffered']
    %7 = vsyncpa [#allocation3], 0
    %8 = vsyncpa [#allocation4], 0
    // Predicated region
    $region2: #{tpu_custom_call.1} parent=1 // pred_check
      _
    $region3: #{tpu_custom_call.1} parent=1 // pred_check_branch
      %10 = sbr.rel (0) target = $region5
    $region4: #{tpu_custom_call.1} parent=1 // pred_region
      %s12 = ssub.s32 256, 256
      %13 = vsyncadd [#allocation3], %s12
      %s15 = sshll.u32 [#allocation2], 4
      %s16 = int_to_ptr.vmem [resolvable:$true] %s15
      %18 = dma.hbm_to_vmem [thread:$0]  %s0, 256, %s16, [#allocation3]
    $region5: #{tpu_custom_call.1} parent=1 // pred_fallthru
      _
    // Predicated region
    $region6: #{tpu_custom_call.1} parent=1 // pred_check
      _
    $region7: #{tpu_custom_call.1} parent=1 // pred_check_branch
      %20 = sbr.rel (0) target = $region9
    $region8: #{tpu_custom_call.1} parent=1 // pred_region
      _
    $region9: #{tpu_custom_call.1} parent=1 // pred_fallthru
      _
    // Predicated region
    $region10: #{tpu_custom_call.1} parent=1 // pred_check
      _
    $region11: #{tpu_custom_call.1} parent=1 // pred_check_branch
      %22 = sbr.rel (0) target = $region13
    $region12: #{tpu_custom_call.1} parent=1 // pred_region
      %23 = dma.done [#allocation3], 256
    $region13: #{tpu_custom_call.1} parent=1 // pred_fallthru
      _
    %v24 = vld [vmem:[#allocation2] sm:$0xff]
    %v25 = vld [vmem:[#allocation2 + $0x8] sm:$0xff]
    %v26 = vld [vmem:[%s1] sm:$0x3]
    %28 = vset.pattern.permute.xlu0 0
    %29 = vperm.xlu0 %28, %v26
    %v30 = vpop.permute.xlu0 %29
    %v32 = vunpack.c.l.s4 269488144
    %v33 = vunpack.c.0.s8 %v32
    %v34 = vlaneseq
    %v35 = vshrl.u32 %v34, 7
    %v36 = vsub.s32 %v33, %v35
    %v37 = vrot.slane %v30, %v36
    %v39 = vmul.f32 %v24, %v37
    %v40 = vmul.f32 %v25, %v37
    %41 = vst [vmem:[#allocation5] sm:$0xff] %v39
    %42 = vst [vmem:[#allocation5 + $0x8] sm:$0xff] %v40
    // Predicated region
    $region14: #{tpu_custom_call.1} parent=1 // pred_check
      _
    $region15: #{tpu_custom_call.1} parent=1 // pred_check_branch
      %44 = sbr.rel (0) target = $region17
    $region16: #{tpu_custom_call.1} parent=1 // pred_region
      %s46 = ssub.s32 256, 256
      %47 = vsyncadd [#allocation4], %s46
      %s49 = sshll.u32 [#allocation5], 4
      %s50 = int_to_ptr.vmem [resolvable:$true] %s49
      %52 = dma.vmem_to_hbm [thread:$0]  %s50, 256, %s2, [#allocation4]
    $region17: #{tpu_custom_call.1} parent=1 // pred_fallthru
      _
    // Predicated region
    $region18: #{tpu_custom_call.1} parent=1 // pred_check
      _
    $region19: #{tpu_custom_call.1} parent=1 // pred_check_branch
      %54 = sbr.rel (0) target = $region21
    $region20: #{tpu_custom_call.1} parent=1 // pred_region
      %55 = dma.done [#allocation4], 256
    $region21: #{tpu_custom_call.1} parent=1 // pred_fallthru
      _
    %56 = vsyncpa [#allocation3], 1
    %57 = vsyncpa [#allocation4], 1

</llo_original>
